<compile_context>
chip_gen: v7x
topology: tpu7x:2x2x1
jax: 0.10.0
libtpu: 0.0.40
codegen_flags: <defaults>
</compile_context>

<pallas_src>
import functools
import math

import jax
import jax.numpy as jnp
from jax.experimental import pallas as pl
from jax.experimental.pallas import tpu as pltpu


# ----------------------------------------------------------------------------
# helpers
# ----------------------------------------------------------------------------
def _tile(dim, target):
    """Largest tile <= target that divides dim (dim itself if small)."""
    if dim <= target:
        return dim
    t = target
    while dim % t:
        t //= 2
    return t


# ----------------------------------------------------------------------------
# Kernel 1: row-tiled LayerNorm (embeddings)
# ----------------------------------------------------------------------------
def _ln_kernel(eps, x_ref, g_ref, b_ref, o_ref):
    x = x_ref[...].astype(jnp.float32)
    mu = jnp.mean(x, axis=-1, keepdims=True)
    var = jnp.mean((x - mu) ** 2, axis=-1, keepdims=True)
    y = (x - mu) * jax.lax.rsqrt(var + eps)
    o_ref[...] = (y * g_ref[...] + b_ref[...]).astype(o_ref.dtype)


def layernorm(x, g, b, eps, out_dtype=jnp.bfloat16, tm=256):
    M, H = x.shape
    tm = _tile(M, tm)
    return pl.pallas_call(
        functools.partial(_ln_kernel, eps),
        grid=(M // tm,),
        in_specs=[pl.BlockSpec((tm, H), lambda i: (i, 0)),
                  pl.BlockSpec((1, H), lambda i: (0, 0)),
                  pl.BlockSpec((1, H), lambda i: (0, 0))],
        out_specs=pl.BlockSpec((tm, H), lambda i: (i, 0)),
        out_shape=jax.ShapeDtypeStruct((M, H), out_dtype),
        compiler_params=pltpu.CompilerParams(dimension_semantics=("parallel",)),
    )(x, g, b)


# ----------------------------------------------------------------------------
# Kernel 2: tiled linear with fused bias + activation epilogue
# ----------------------------------------------------------------------------
def _linear_kernel(act, x_ref, w_ref, b_ref, o_ref, acc_ref):
    k = pl.program_id(2)

    @pl.when(k == 0)
    def _():
        acc_ref[...] = jnp.zeros_like(acc_ref)

    acc_ref[...] += jnp.dot(x_ref[...], w_ref[...],
                            preferred_element_type=jnp.float32)

    @pl.when(k == pl.num_programs(2) - 1)
    def _():
        y = acc_ref[...] + b_ref[...].astype(jnp.float32)
        if act == "gelu":
            # TODO(synk): HF BERT default is erf-GELU; tanh-approx used here.
            y = jax.nn.gelu(y, approximate=True)
        elif act == "tanh":
            y = jnp.tanh(y)
        o_ref[...] = y.astype(o_ref.dtype)


def linear(x, w, b, act="none", out_dtype=jnp.bfloat16,
           tm=256, tn=512, tk=256):
    M, K = x.shape
    N = w.shape[1]
    tm = _tile(M, tm)
    tn = _tile(N, tn)
    tk = _tile(K, tk)
    return pl.pallas_call(
        functools.partial(_linear_kernel, act),
        grid=(M // tm, N // tn, K // tk),
        in_specs=[pl.BlockSpec((tm, tk), lambda i, j, k: (i, k)),
                  pl.BlockSpec((tk, tn), lambda i, j, k: (k, j)),
                  pl.BlockSpec((1, tn), lambda i, j, k: (0, j))],
        out_specs=pl.BlockSpec((tm, tn), lambda i, j, k: (i, j)),
        out_shape=jax.ShapeDtypeStruct((M, N), out_dtype),
        scratch_shapes=[pltpu.VMEM((tm, tn), jnp.float32)],
        compiler_params=pltpu.CompilerParams(
            dimension_semantics=("parallel", "parallel", "arbitrary")),
    )(x, w, b.reshape(1, N))


# ----------------------------------------------------------------------------
# Kernel 3: flash-style attention with in-kernel mask broadcast
# ----------------------------------------------------------------------------
def _flash_kernel(scale, q_ref, k_ref, v_ref, mask_ref, o_ref,
                  m_sc, l_sc, acc_sc):
    kv = pl.program_id(2)

    @pl.when(kv == 0)
    def _():
        m_sc[...] = jnp.full_like(m_sc, -jnp.inf)
        l_sc[...] = jnp.zeros_like(l_sc)
        acc_sc[...] = jnp.zeros_like(acc_sc)

    q = q_ref[0]                      # (tq, dh) bf16
    kt = k_ref[0]                     # (tkv, dh) bf16
    v = v_ref[0]                      # (tkv, dh) bf16
    s = jax.lax.dot_general(q, kt, (((1,), (1,)), ((), ())),
                            preferred_element_type=jnp.float32) * scale
    s = s + mask_ref[0]               # (1, tkv) additive mask -> broadcast

    m_prev = m_sc[...]
    m_new = jnp.maximum(m_prev, jnp.max(s, axis=-1, keepdims=True))
    alpha = jnp.exp(m_prev - m_new)
    p = jnp.exp(s - m_new)
    l_sc[...] = alpha * l_sc[...] + jnp.sum(p, axis=-1, keepdims=True)
    acc_sc[...] = alpha * acc_sc[...] + jnp.dot(
        p.astype(v.dtype), v, preferred_element_type=jnp.float32)
    m_sc[...] = m_new

    @pl.when(kv == pl.num_programs(2) - 1)
    def _():
        inv_l = pl.reciprocal(l_sc[...], approx=True)
        o_ref[0] = (acc_sc[...] * inv_l).astype(o_ref.dtype)


def flash_attention(q, k, v, add_mask, nh, scale, tq=256, tkv=256):
    # q/k/v: [B*nh, S, dh] bf16; add_mask: [B, 1, S] f32 additive (-10000 / 0)
    BH, S, dh = q.shape
    tq = _tile(S, tq)
    tkv = _tile(S, tkv)
    # TODO(synk): output last dim is dh (<128) -> not lane-dense; packing two
    # heads per block would improve store efficiency.
    return pl.pallas_call(
        functools.partial(_flash_kernel, scale),
        grid=(BH, S // tq, S // tkv),
        in_specs=[
            pl.BlockSpec((1, tq, dh), lambda bh, qi, ki: (bh, qi, 0)),
            pl.BlockSpec((1, tkv, dh), lambda bh, qi, ki: (bh, ki, 0)),
            pl.BlockSpec((1, tkv, dh), lambda bh, qi, ki: (bh, ki, 0)),
            pl.BlockSpec((1, 1, tkv), lambda bh, qi, ki: (bh // nh, 0, ki)),
        ],
        out_specs=pl.BlockSpec((1, tq, dh), lambda bh, qi, ki: (bh, qi, 0)),
        out_shape=jax.ShapeDtypeStruct((BH, S, dh), q.dtype),
        scratch_shapes=[pltpu.VMEM((tq, 1), jnp.float32),
                        pltpu.VMEM((tq, 1), jnp.float32),
                        pltpu.VMEM((tq, dh), jnp.float32)],
        compiler_params=pltpu.CompilerParams(
            dimension_semantics=("parallel", "parallel", "arbitrary")),
    )(q, k, v, add_mask)


# ----------------------------------------------------------------------------
# Kernel 4: tiled linear + bias + residual add + LayerNorm (N = full hidden)
# ----------------------------------------------------------------------------
def _linear_res_ln_kernel(eps, x_ref, w_ref, b_ref, r_ref, g_ref, bt_ref,
                          o_ref, acc_ref):
    k = pl.program_id(1)

    @pl.when(k == 0)
    def _():
        acc_ref[...] = jnp.zeros_like(acc_ref)

    acc_ref[...] += jnp.dot(x_ref[...], w_ref[...],
                            preferred_element_type=jnp.float32)

    @pl.when(k == pl.num_programs(1) - 1)
    def _():
        y = acc_ref[...] + b_ref[...] + r_ref[...].astype(jnp.float32)
        mu = jnp.mean(y, axis=-1, keepdims=True)
        var = jnp.mean((y - mu) ** 2, axis=-1, keepdims=True)
        yn = (y - mu) * jax.lax.rsqrt(var + eps)
        o_ref[...] = (yn * g_ref[...] + bt_ref[...]).astype(o_ref.dtype)


def linear_res_ln(x, w, b, residual, gamma, beta, eps, tm=256, tk=512):
    M, K = x.shape
    N = w.shape[1]
    tm = _tile(M, tm)
    tk = _tile(K, tk)
    return pl.pallas_call(
        functools.partial(_linear_res_ln_kernel, eps),
        grid=(M // tm, K // tk),
        in_specs=[pl.BlockSpec((tm, tk), lambda i, k: (i, k)),
                  pl.BlockSpec((tk, N), lambda i, k: (k, 0)),
                  pl.BlockSpec((1, N), lambda i, k: (0, 0)),
                  pl.BlockSpec((tm, N), lambda i, k: (i, 0)),
                  pl.BlockSpec((1, N), lambda i, k: (0, 0)),
                  pl.BlockSpec((1, N), lambda i, k: (0, 0))],
        out_specs=pl.BlockSpec((tm, N), lambda i, k: (i, 0)),
        out_shape=jax.ShapeDtypeStruct((M, N), jnp.bfloat16),
        scratch_shapes=[pltpu.VMEM((tm, N), jnp.float32)],
        compiler_params=pltpu.CompilerParams(
            dimension_semantics=("parallel", "arbitrary")),
    )(x, w, b.reshape(1, N), residual, gamma, beta)


# ----------------------------------------------------------------------------
# Kernel 5: classifier head (+ sigmoid, optional BCELoss)
# ----------------------------------------------------------------------------
def _head_infer_kernel(x_ref, w_ref, b_ref, probs_ref):
    logits = jnp.dot(x_ref[...], w_ref[...],
                     preferred_element_type=jnp.float32) + b_ref[...]
    probs_ref[...] = jax.nn.sigmoid(logits).astype(probs_ref.dtype)


def _head_loss_kernel(x_ref, w_ref, b_ref, y_ref, probs_ref, loss_ref):
    logits = jnp.dot(x_ref[...], w_ref[...],
                     preferred_element_type=jnp.float32) + b_ref[...]
    p = jax.nn.sigmoid(logits)
    probs_ref[...] = p.astype(probs_ref.dtype)
    y = y_ref[...]
    # torch.nn.BCELoss semantics: log clamped at -100, mean reduction.
    logp = jnp.maximum(jnp.log(p), -100.0)
    log1mp = jnp.maximum(jnp.log(1.0 - p), -100.0)
    per = -(y * logp + (1.0 - y) * log1mp)
    loss = jnp.sum(per) / float(per.shape[0] * per.shape[1])
    loss_ref[...] = jnp.reshape(loss, (1, 1)).astype(loss_ref.dtype)


def classifier_head(pooled, w, b, labels=None):
    B, Hp = pooled.shape
    C = w.shape[1]
    b2 = b.reshape(1, C)

    def spec2(shape):
        return pl.BlockSpec(shape, lambda i: (0, 0))

    if labels is None:
        probs = pl.pallas_call(
            _head_infer_kernel,
            grid=(1,),
            in_specs=[spec2((B, Hp)), spec2((Hp, C)), spec2((1, C))],
            out_specs=spec2((B, C)),
            out_shape=jax.ShapeDtypeStruct((B, C), jnp.float32),
        )(pooled, w, b2)
        return probs, None

    probs, loss = pl.pallas_call(
        _head_loss_kernel,
        grid=(1,),
        in_specs=[spec2((B, Hp)), spec2((Hp, C)), spec2((1, C)), spec2((B, C))],
        out_specs=(spec2((B, C)), spec2((1, 1))),
        out_shape=(jax.ShapeDtypeStruct((B, C), jnp.float32),
                   jax.ShapeDtypeStruct((1, 1), jnp.float32)),
    )(pooled, w, b2, labels)
    return probs, loss


# ----------------------------------------------------------------------------
# Parameters (deterministic synthetic init; shapes follow BertModel config)
# ----------------------------------------------------------------------------
def init_params(key, cfg):
    H, I = cfg["hidden"], cfg["inter"]
    C = cfg["num_classes"]

    def normal(k, shape, dtype=jnp.bfloat16):
        return (0.02 * jax.random.normal(k, shape, jnp.float32)).astype(dtype)

    keys = iter(jax.random.split(key, 5 + cfg["layers"] * 4))

    params = dict(
        word_emb=normal(next(keys), (cfg["vocab_size"], H), jnp.float32),
        pos_emb=normal(next(keys), (cfg["max_pos"], H), jnp.float32),
        type_emb=normal(next(keys), (cfg["type_vocab"], H), jnp.float32),
        emb_ln_g=jnp.ones((1, H), jnp.float32),
        emb_ln_b=jnp.zeros((1, H), jnp.float32),
        pool_w=normal(next(keys), (H, H)),
        pool_b=jnp.zeros((H,), jnp.float32),
        cls_w=normal(next(keys), (H, C), jnp.float32),
        cls_b=jnp.zeros((C,), jnp.float32),
        layers=[],
    )
    for _ in range(cfg["layers"]):
        lp = dict(
            qkv_w=normal(next(keys), (H, 3 * H)),          # fused Q|K|V
            qkv_b=jnp.zeros((3 * H,), jnp.float32),
            o_w=normal(next(keys), (H, H)),
            o_b=jnp.zeros((H,), jnp.float32),
            ln1_g=jnp.ones((1, H), jnp.float32),
            ln1_b=jnp.zeros((1, H), jnp.float32),
            i_w=normal(next(keys), (H, I)),
            i_b=jnp.zeros((I,), jnp.float32),
            fo_w=normal(next(keys), (I, H)),
            fo_b=jnp.zeros((H,), jnp.float32),
            ln2_g=jnp.ones((1, H), jnp.float32),
            ln2_b=jnp.zeros((1, H), jnp.float32),
        )
        params["layers"].append(lp)
    return params


# ----------------------------------------------------------------------------
# Forward pass = BertClassifier.forward
# ----------------------------------------------------------------------------
def bert_classifier_forward(params, cfg, input_ids, attention_mask=None,
                            token_type_ids=None, labels=None):
    B, S = input_ids.shape
    H, nh = cfg["hidden"], cfg["heads"]
    dh = H // nh
    eps = cfg["eps"]
    M = B * S

    if attention_mask is None:
        attention_mask = jnp.ones((B, S), jnp.float32)
    if token_type_ids is None:
        token_type_ids = jnp.zeros((B, S), jnp.int32)

    # --- embeddings (gather is glue; sum + layernorm in Pallas)
    we = jnp.take(params["word_emb"], input_ids, axis=0)          # [B,S,H]
    pe = params["pos_emb"][:S][None, :, :]                        # [1,S,H]
    te = jnp.take(params["type_emb"], token_type_ids, axis=0)     # [B,S,H]
    emb = (we + pe + te).reshape(M, H)
    h = layernorm(emb, params["emb_ln_g"], params["emb_ln_b"], eps)   # bf16

    # --- tiny additive mask, broadcast in-kernel (no [B*nh,S,S] in HBM)
    add_mask = ((1.0 - attention_mask.astype(jnp.float32)) * -10000.0
                ).reshape(B, 1, S)

    scale = 1.0 / math.sqrt(dh)

    # TODO(synk): head split/merge still use XLA transposes; folding the head
    # layout into the matmul out_spec would remove these HBM copies.
    def split_heads(x):   # [M, H] -> [B*nh, S, dh]
        return x.reshape(B, S, nh, dh).transpose(0, 2, 1, 3).reshape(B * nh, S, dh)

    def merge_heads(x):   # [B*nh, S, dh] -> [M, H]
        return x.reshape(B, nh, S, dh).transpose(0, 2, 1, 3).reshape(M, H)

    # --- encoder layers (5 pallas_calls per layer)
    for lp in params["layers"]:
        qkv = linear(h, lp["qkv_w"], lp["qkv_b"])                  # [M, 3H]
        q = split_heads(qkv[:, :H])
        k = split_heads(qkv[:, H:2 * H])
        v = split_heads(qkv[:, 2 * H:])
        ctx = flash_attention(q, k, v, add_mask, nh, scale)
        h = linear_res_ln(merge_heads(ctx), lp["o_w"], lp["o_b"], h,
                          lp["ln1_g"], lp["ln1_b"], eps)
        inter = linear(h, lp["i_w"], lp["i_b"], act="gelu")        # [M, I]
        h = linear_res_ln(inter, lp["fo_w"], lp["fo_b"], h,
                          lp["ln2_g"], lp["ln2_b"], eps)

    # --- pooler: first token, dense + tanh  (== outputs[1] of BertModel)
    cls_tok = h.reshape(B, S, H)[:, 0, :]
    pooled = linear(cls_tok, params["pool_w"], params["pool_b"], act="tanh",
                    out_dtype=jnp.float32)

    # --- classifier + sigmoid (+ BCELoss only if labels given)
    probs, loss = classifier_head(pooled, params["cls_w"], params["cls_b"],
                                  labels)
    loss_out = loss[0, 0] if labels is not None else jnp.float32(0.0)
    return loss_out, probs


# ----------------------------------------------------------------------------
if __name__ == "__main__":
    cfg = dict(vocab_size=100, hidden=32, layers=2, heads=4, inter=64,
               max_pos=16, type_vocab=2, num_classes=3, eps=1e-12)

    key = jax.random.PRNGKey(0)
    k_param, k_ids, k_lbl = jax.random.split(key, 3)

    params = init_params(k_param, cfg)

    B, S = 2, 8
    input_ids = jax.random.randint(k_ids, (B, S), 0, cfg["vocab_size"],
                                   dtype=jnp.int32)
    attention_mask = jnp.ones((B, S), jnp.float32)
    labels = (jax.random.uniform(k_lbl, (B, cfg["num_classes"])) > 0.5
              ).astype(jnp.float32)

    loss, probs = bert_classifier_forward(params, cfg, input_ids,
                                          attention_mask=attention_mask,
                                          labels=labels)
    jax.block_until_ready((loss, probs))
    assert probs.shape == (B, cfg["num_classes"])
    assert bool(jnp.all(jnp.isfinite(probs))) and bool(jnp.isfinite(loss))

    # also exercise the no-labels (inference) path that skips the BCE kernel
    loss0, probs0 = bert_classifier_forward(params, cfg, input_ids,
                                            attention_mask=attention_mask)
    jax.block_until_ready((loss0, probs0))
    assert bool(jnp.all(jnp.isfinite(probs0)))

    print("KERNEL_OK")
</pallas_src>

<mosaic_0001>
module attributes {stable_mosaic.version = 11 : i64} {
  func.func @_ln_kernel(%arg0: i32, %arg1: memref<16x32xf32, #tpu.memory_space<vmem>>, %arg2: memref<1x32xf32, #tpu.memory_space<vmem>>, %arg3: memref<1x32xf32, #tpu.memory_space<vmem>>, %arg4: memref<16x32xbf16, #tpu.memory_space<vmem>>) attributes {dimension_semantics = [#tpu.dimension_semantics<parallel>], iteration_bounds = array<i64: 1>, scalar_prefetch = 0 : i64, scratch_operands = 0 : i64, tpu.core_type = #tpu.core_type<tc>, window_params = [{transform_indices = @transform_0, window_bounds = array<i64: 16, 32>}, {pipeline_mode = #tpu.pipeline_mode<synchronous>, transform_indices = @transform_1, window_bounds = array<i64: 1, 32>}, {pipeline_mode = #tpu.pipeline_mode<synchronous>, transform_indices = @transform_2, window_bounds = array<i64: 1, 32>}, {transform_indices = @transform_3, window_bounds = array<i64: 16, 32>}]} {
    %c0 = arith.constant 0 : index
    %c0_0 = arith.constant 0 : index
    %0 = vector.load %arg1[%c0, %c0_0] : memref<16x32xf32, #tpu.memory_space<vmem>>, vector<16x32xf32>
    %cst = arith.constant dense<0.000000e+00> : vector<16xf32>
    %1 = vector.multi_reduction <add>, %0, %cst [1] : vector<16x32xf32> to vector<16xf32>
    %2 = vector.shape_cast %1 : vector<16xf32> to vector<16x1xf32>
    %cst_1 = arith.constant 3.200000e+01 : f32
    %3 = vector.broadcast %cst_1 : f32 to vector<16x1xf32>
    %4 = arith.divf %2, %3 : vector<16x1xf32>
    %5 = vector.broadcast %4 : vector<16x1xf32> to vector<16x32xf32>
    %6 = arith.subf %0, %5 : vector<16x32xf32>
    %7 = arith.mulf %6, %6 : vector<16x32xf32>
    %cst_2 = arith.constant dense<0.000000e+00> : vector<16xf32>
    %8 = vector.multi_reduction <add>, %7, %cst_2 [1] : vector<16x32xf32> to vector<16xf32>
    %9 = vector.shape_cast %8 : vector<16xf32> to vector<16x1xf32>
    %cst_3 = arith.constant 3.200000e+01 : f32
    %10 = vector.broadcast %cst_3 : f32 to vector<16x1xf32>
    %11 = arith.divf %9, %10 : vector<16x1xf32>
    %12 = vector.broadcast %4 : vector<16x1xf32> to vector<16x32xf32>
    %13 = arith.subf %0, %12 : vector<16x32xf32>
    %cst_4 = arith.constant 9.99999996E-13 : f32
    %14 = vector.broadcast %cst_4 : f32 to vector<16x1xf32>
    %15 = arith.addf %11, %14 : vector<16x1xf32>
    %16 = math.rsqrt %15 : vector<16x1xf32>
    %17 = vector.broadcast %16 : vector<16x1xf32> to vector<16x32xf32>
    %18 = arith.mulf %13, %17 : vector<16x32xf32>
    %c0_5 = arith.constant 0 : index
    %c0_6 = arith.constant 0 : index
    %19 = vector.load %arg2[%c0_5, %c0_6] : memref<1x32xf32, #tpu.memory_space<vmem>>, vector<1x32xf32>
    %20 = vector.broadcast %19 : vector<1x32xf32> to vector<16x32xf32>
    %21 = arith.mulf %18, %20 : vector<16x32xf32>
    %c0_7 = arith.constant 0 : index
    %c0_8 = arith.constant 0 : index
    %22 = vector.load %arg3[%c0_7, %c0_8] : memref<1x32xf32, #tpu.memory_space<vmem>>, vector<1x32xf32>
    %23 = vector.broadcast %22 : vector<1x32xf32> to vector<16x32xf32>
    %24 = arith.addf %21, %23 : vector<16x32xf32>
    %25 = arith.truncf %24 : vector<16x32xf32> to vector<16x32xbf16>
    %c0_9 = arith.constant 0 : index
    %c0_10 = arith.constant 0 : index
    %26 = vector.load %arg4[%c0_9, %c0_10] : memref<16x32xbf16, #tpu.memory_space<vmem>>, vector<16x32xbf16>
    tpu.vector_store %arg4[%c0_9, %c0_10], %25 {strides = array<i32>} : memref<16x32xbf16, #tpu.memory_space<vmem>>, vector<16x32xbf16>,
    return
  }
  func.func @transform_0(%arg0: i32) -> (i32, i32) {
    %c0_i32 = arith.constant 0 : i32
    %c0_i32_0 = arith.constant 0 : i32
    return %arg0, %c0_i32 : i32, i32
  }
  func.func @transform_1(%arg0: i32) -> (i32, i32) {
    %c0_i32 = arith.constant 0 : i32
    %c0_i32_0 = arith.constant 0 : i32
    %c0_i32_1 = arith.constant 0 : i32
    return %c0_i32, %c0_i32_0 : i32, i32
  }
  func.func @transform_2(%arg0: i32) -> (i32, i32) {
    %c0_i32 = arith.constant 0 : i32
    %c0_i32_0 = arith.constant 0 : i32
    %c0_i32_1 = arith.constant 0 : i32
    return %c0_i32, %c0_i32_0 : i32, i32
  }
  func.func @transform_3(%arg0: i32) -> (i32, i32) {
    %c0_i32 = arith.constant 0 : i32
    %c0_i32_0 = arith.constant 0 : i32
    return %arg0, %c0_i32 : i32, i32
  }
}

</mosaic_0001>

<llo_original>
// kernel: tpu_custom_call.1
$region0: #{tpu_custom_call.1}
  #allocation0 [shape = 'u32[]', space=smem, size = 0x4, offset = 0x4, fixed_abs, tag = 'smem constant byte address 0x4 - core index']
  #allocation1 [shape = 'u32[144,128]{1,0:T(1,128)}', space=vmem, size = 0x12000, scoped, tag = 'internal scratch']
  %s0 = inlined_call_operand.hbm [shape: f32[16,32], index: 0, kind: input, shape index: {}]
  %s1 = inlined_call_operand.vmem [shape: f32[1,32], index: 1, kind: input, shape index: {}]
  %s2 = inlined_call_operand.vmem [shape: f32[1,32], index: 2, kind: input, shape index: {}]
  %s3 = inlined_call_operand.hbm [shape: bf16[16,32], index: 3, kind: output, shape index: {}]
  %s4 = sld [smem:[#allocation0]]
  $region26: #{tpu_custom_call.1} parent=0
    _
  %s6 = ssub.s32 1, %s4
  %s7 = scalar_select 0, %s6, %s4
  $region1: #{tpu_custom_call.1} parent=0
    #allocation2 [shape = 'u8[8192]{0}', space=vmem, size = 0x2000, scoped, tag = 'input window, operand 0, single buffered']
    #allocation3 [shape = 's32[1]{0}', space=sflag, size = 0x4, scoped, tag = 'scoped memory for tpu_custom_call.1']
    #allocation4 [shape = 's32[1]{0}', space=sflag, size = 0x4, scoped, tag = 'scoped memory for tpu_custom_call.1']
    #allocation5 [shape = 'u8[4096]{0}', space=vmem, size = 0x1000, scoped, tag = 'output window, operand 0, single buffered']
    %8 = vsyncpa [#allocation3], 0
    %9 = vsyncpa [#allocation4], 0
    // Predicated region
    $region2: #{tpu_custom_call.1} parent=1 // pred_check
      _
    $region3: #{tpu_custom_call.1} parent=1 // pred_check_branch
      %11 = sbr.rel (0) target = $region5
    $region4: #{tpu_custom_call.1} parent=1 // pred_region
      %s13 = ssub.s32 256, 256
      %14 = vsyncadd [#allocation3], %s13
      %s15 = sshll.u32 [#allocation2], 4
      %s16 = int_to_ptr.vmem [resolvable:$true] %s15
      %21 = dma.hbm_to_vmem [thread:$0]  %s0, 256, %s16, [#allocation3], 128, 128, 8
    $region5: #{tpu_custom_call.1} parent=1 // pred_fallthru
      _
    // Predicated region
    $region6: #{tpu_custom_call.1} parent=1 // pred_check
      _
    $region7: #{tpu_custom_call.1} parent=1 // pred_check_branch
      %23 = sbr.rel (0) target = $region9
    $region8: #{tpu_custom_call.1} parent=1 // pred_region
      _
    $region9: #{tpu_custom_call.1} parent=1 // pred_fallthru
      _
    // Predicated region
    $region10: #{tpu_custom_call.1} parent=1 // pred_check
      _
    $region11: #{tpu_custom_call.1} parent=1 // pred_check_branch
      %25 = sbr.rel (0) target = $region13
    $region12: #{tpu_custom_call.1} parent=1 // pred_region
      _
    $region13: #{tpu_custom_call.1} parent=1 // pred_fallthru
      _
    // Predicated region
    $region14: #{tpu_custom_call.1} parent=1 // pred_check
      _
    $region15: #{tpu_custom_call.1} parent=1 // pred_check_branch
      %27 = sbr.rel (0) target = $region17
    $region16: #{tpu_custom_call.1} parent=1 // pred_region
      %28 = dma.done [#allocation3], 256
    $region17: #{tpu_custom_call.1} parent=1 // pred_fallthru
      _
    %v29 = vld [vmem:[#allocation2] sm:$0xff]
    %v30 = vld [vmem:[#allocation2 + $0x8] sm:$0xff]
    %vm31 = vcmask 261120
    %v32 = vsel %vm31, %v29, 0.0
    %33 = vadd.xlane.f32.xlu0 %v32
    %v34 = vpop.xlane.xlu0 %33
    %v35 = vsel %vm31, %v30, 0.0
    %36 = vadd.xlane.f32.xlu0 %v35
    %v37 = vpop.xlane.xlu0 %36
    %v38 = vrcp.pop 32.0
    %v39 = vmul.f32 %v34, %v38
    %v40 = vmul.f32 %v37, %v38
    %v41 = vsub.f32 %v29, %v39
    %v42 = vsub.f32 %v30, %v40
    %v43 = vmul.f32 %v41, %v41
    %v44 = vmul.f32 %v42, %v42
    %v45 = vsel %vm31, %v43, 0.0
    %46 = vadd.xlane.f32.xlu0 %v45
    %v47 = vpop.xlane.xlu0 %46
    %v48 = vsel %vm31, %v44, 0.0
    %49 = vadd.xlane.f32.xlu0 %v48
    %v50 = vpop.xlane.xlu0 %49
    %v51 = vmul.f32 %v47, %v38
    %v52 = vmul.f32 %v50, %v38
    %v53 = vadd.f32 %v51, 1e-12
    %v54 = vadd.f32 %v52, 1e-12
    %v55 = vrsqrt.pop %v53
    %v56 = vrsqrt.pop %v54
    %v57 = vmul.f32 %v41, %v55
    %v58 = vmul.f32 %v42, %v56
    %v59 = vld [vmem:[%s1] sm:$0x1]
    %v61 = vlaneseq
    %v62 = vshrl.u32 %v61, 7
    %v63 = vsub.s32 0, %v62
    %v64 = vrot.slane %v59, %v63
    %v66 = vmul.f32 %v57, %v64
    %v67 = vmul.f32 %v58, %v64
    %v68 = vld [vmem:[%s2] sm:$0x1]
    %v70 = vlaneseq
    %v71 = vshrl.u32 %v70, 7
    %v72 = vsub.s32 0, %v71
    %v73 = vrot.slane %v68, %v72
    %v75 = vadd.f32 %v66, %v73
    %v76 = vadd.f32 %v67, %v73
    %v77 = vpack.c.bf16 %v76, %v75
    %v79 = vunpack.c.l.b16 %v77
    %v80 = vunpack.c.h.b16 %v77
    %v81 = vpack.c.b16 %v79, %v79
    %v82 = vpack.c.b16 %v80, %v80
    %vm85 = vcmask 257024
    %86 = vst.msk [vmem:[#allocation5] sm:$0xf] %vm85, %v81
    %87 = vst.msk [vmem:[#allocation5 + $0x4] sm:$0xf] %vm85, %v82
    // Predicated region
    $region18: #{tpu_custom_call.1} parent=1 // pred_check
      _
    $region19: #{tpu_custom_call.1} parent=1 // pred_check_branch
      %89 = sbr.rel (0) target = $region21
    $region20: #{tpu_custom_call.1} parent=1 // pred_region
      %s91 = ssub.s32 128, 128
      %92 = vsyncadd [#allocation4], %s91
      %s93 = sshll.u32 [#allocation5], 4
      %s94 = int_to_ptr.vmem [resolvable:$true] %s93
      %99 = dma.vmem_to_hbm [thread:$0]  %s94, 128, %s3, [#allocation4], 64, 64, 4
    $region21: #{tpu_custom_call.1} parent=1 // pred_fallthru
      _
    // Predicated region
    $region22: #{tpu_custom_call.1} parent=1 // pred_check
      _
    $region23: #{tpu_custom_call.1} parent=1 // pred_check_branch
      %101 = sbr.rel (0) target = $region25
    $region24: #{tpu_custom_call.1} parent=1 // pred_region
      %102 = dma.done [#allocation4], 128
    $region25: #{tpu_custom_call.1} parent=1 // pred_fallthru
      _
    %103 = vsyncpa [#allocation3], 1
    %104 = vsyncpa [#allocation4], 1

</llo_original>
